<compile_context>
chip_gen: v6e
topology: v6e:2x2x1
jax: 0.10.0
libtpu: 0.0.40
codegen_flags: <defaults>
</compile_context>

<pallas_src>
import functools

import jax
import jax.numpy as jnp
from jax.experimental import pallas as pl
from jax.experimental.pallas import tpu as pltpu


def _vmem_limit_bytes():
    """Generation-aware VMEM limit: half of physical VMEM, capped at 64 MiB."""
    cap = 64 << 20
    try:
        info = pltpu.get_tpu_info()
        cap = int(getattr(info, "vmem_capacity_bytes", cap))
    except Exception:
        cap = 64 << 20
    return max(16 << 20, min(cap // 2, 64 << 20))


_VMEM_LIMIT_BYTES = _vmem_limit_bytes()


def _choose_tw(hw, c, oc_total, vmem_limit):
    """Spatial (lane) tile width.

    Largest power-of-two multiple of 128 (<= 8192) whose double-buffered
    input + output footprint fits in ~half the VMEM limit; if the whole level
    fits in one block, use the full spatial extent (always a legal block)."""
    budget = vmem_limit // 2
    bytes_per_col = 2 * (c + oc_total) * 4      # double-buffered x + outputs, f32
    tw = 8192
    while tw > 512 and tw * bytes_per_col > budget:
        tw //= 2
    if hw <= tw:
        return hw                               # single full-extent block
    return tw                                   # 128-multiple tile, cdiv grid


def _anchor_head_kernel(x_ref, wc_ref, bc_ref, wr_ref, br_ref,
                        cls_ref, reg_ref):
    """One (batch, spatial-tile) grid step, NCHW layout throughout.

    x_ref   : (1, C, TW)       feature tile (spatial flattened into lanes)
    wc_ref  : (OC_cls, C)      conv_cls weight (bf16), resident
    bc_ref  : (OC_cls, 1)      conv_cls bias (f32), resident
    wr_ref  : (OC_reg, C)      conv_reg weight (bf16), resident
    br_ref  : (OC_reg, 1)      conv_reg bias (f32), resident
    cls_ref : (1, OC_cls, TW)  cls-score tile
    reg_ref : (1, OC_reg, TW)  bbox-delta tile
    """
    x = x_ref[0].astype(wc_ref.dtype)            # (C, TW) -> bf16 for the MXU
    cls = jnp.dot(wc_ref[...], x, preferred_element_type=jnp.float32)
    reg = jnp.dot(wr_ref[...], x, preferred_element_type=jnp.float32)
    cls_ref[0] = (cls + bc_ref[...]).astype(cls_ref.dtype)
    reg_ref[0] = (reg + br_ref[...]).astype(reg_ref.dtype)


@functools.partial(jax.jit, static_argnames=("tw",))
def _level_forward(x_nchw, w_cls, b_cls, w_reg, b_reg, *, tw):
    n, c, h, w = x_nchw.shape
    hw = h * w
    oc_cls = w_cls.shape[0]
    oc_reg = w_reg.shape[0]
    x3 = x_nchw.reshape(n, c, hw)                # free view of contiguous NCHW

    grid = (n, pl.cdiv(hw, tw))
    cls3, reg3 = pl.pallas_call(
        _anchor_head_kernel,
        out_shape=(
            jax.ShapeDtypeStruct((n, oc_cls, hw), x_nchw.dtype),
            jax.ShapeDtypeStruct((n, oc_reg, hw), x_nchw.dtype),
        ),
        grid_spec=pltpu.PrefetchScalarGridSpec(
            num_scalar_prefetch=0,
            grid=grid,
            in_specs=[
                pl.BlockSpec((1, c, tw), lambda i, j: (i, 0, j)),   # x tile
                pl.BlockSpec((oc_cls, c), lambda i, j: (0, 0)),     # w_cls
                pl.BlockSpec((oc_cls, 1), lambda i, j: (0, 0)),     # b_cls
                pl.BlockSpec((oc_reg, c), lambda i, j: (0, 0)),     # w_reg
                pl.BlockSpec((oc_reg, 1), lambda i, j: (0, 0)),     # b_reg
            ],
            out_specs=(
                pl.BlockSpec((1, oc_cls, tw), lambda i, j: (i, 0, j)),
                pl.BlockSpec((1, oc_reg, tw), lambda i, j: (i, 0, j)),
            ),
        ),
        compiler_params=pltpu.CompilerParams(
            dimension_semantics=("parallel", "parallel"),
            vmem_limit_bytes=_VMEM_LIMIT_BYTES,
        ),
    )(x3, w_cls, b_cls, w_reg, b_reg)

    return cls3.reshape(n, oc_cls, h, w), reg3.reshape(n, oc_reg, h, w)


class AnchorHeadPallas:
    """Pallas implementation of AnchorHead.forward (multi-level 1x1 conv heads)."""

    def __init__(self, num_classes, in_channels, feat_channels=256,
                 anchor_scales=(8, 16, 32), anchor_ratios=(0.5, 1.0, 2.0),
                 compute_dtype=jnp.bfloat16, seed=0):
        self.num_classes = num_classes
        self.in_channels = in_channels
        self.feat_channels = feat_channels
        self.cls_out_channels = num_classes - 1          # use_sigmoid_cls=True
        self.num_anchors = len(anchor_ratios) * len(anchor_scales)
        self.oc_cls = self.num_anchors * self.cls_out_channels
        self.oc_reg = self.num_anchors * 4

        # Deterministic init (normal std=0.01, zero bias), matching
        # nn.Conv2d(feat_channels, oc, 1).  PyTorch weight (OC, C, 1, 1) ->
        # stored as (OC, C): exactly the orientation the NCHW kernel needs.
        k1, k2 = jax.random.split(jax.random.PRNGKey(seed))
        self.w_cls_f32 = (0.01 * jax.random.normal(
            k1, (self.oc_cls, feat_channels))).astype(jnp.float32)
        self.w_reg_f32 = (0.01 * jax.random.normal(
            k2, (self.oc_reg, feat_channels))).astype(jnp.float32)
        self.b_cls = jnp.zeros((self.oc_cls, 1), jnp.float32)
        self.b_reg = jnp.zeros((self.oc_reg, 1), jnp.float32)

        # bf16 weight copies used by the kernel (cast once; biases stay f32).
        self.w_cls = self.w_cls_f32.astype(compute_dtype)
        self.w_reg = self.w_reg_f32.astype(compute_dtype)

    def forward_single(self, x):
        n, c, h, w = x.shape
        assert c == self.feat_channels
        tw = _choose_tw(h * w, c, self.oc_cls + self.oc_reg, _VMEM_LIMIT_BYTES)
        return _level_forward(x, self.w_cls, self.b_cls,
                              self.w_reg, self.b_reg, tw=tw)

    def forward(self, feats):
        """feats: tuple/list of NCHW feature maps -> ([cls_scores], [bbox_preds]),
        mirroring multi_apply(self.forward_single, feats)."""
        results = [self.forward_single(f) for f in feats]
        cls_scores = [r[0] for r in results]
        bbox_preds = [r[1] for r in results]
        return cls_scores, bbox_preds

    # TODO(synk): get_bboxes / get_bboxes_single / multiclass_nms (anchor grid
    # generation, sigmoid/topk, delta2bbox, NMS) are data-dependent
    # post-processing outside the forward hot path and are not implemented as
    # Pallas kernels.


def _reference_forward_single(head, x):
    """Pure-JAX f32 reference for one level (NCHW in, NCHW out)."""
    cls = jnp.einsum("nchw,oc->nohw", x, head.w_cls_f32) \
        + head.b_cls.reshape(1, -1, 1, 1)
    reg = jnp.einsum("nchw,oc->nohw", x, head.w_reg_f32) \
        + head.b_reg.reshape(1, -1, 1, 1)
    return cls, reg


if __name__ == "__main__":
    # Small, module-consistent shapes: batch=2, feat_channels=32, two FPN levels.
    num_classes = 2            # person detector: cls_out_channels = 1
    feat_channels = 32
    head = AnchorHeadPallas(num_classes=num_classes, in_channels=feat_channels,
                            feat_channels=feat_channels, seed=0)

    key = jax.random.PRNGKey(0)
    k1, k2 = jax.random.split(key)
    feats = (
        jax.random.normal(k1, (2, feat_channels, 16, 16), jnp.float32),
        jax.random.normal(k2, (2, feat_channels, 8, 8), jnp.float32),
    )

    cls_scores, bbox_preds = head.forward(feats)
    jax.block_until_ready(cls_scores)
    jax.block_until_ready(bbox_preds)

    # Sanity check against the f32 reference (bf16 MXU operands -> loose tol).
    ok = True
    max_err = 0.0
    for f, cs, bp in zip(feats, cls_scores, bbox_preds):
        rcs, rbp = _reference_forward_single(head, f)
        assert cs.shape == (f.shape[0], head.oc_cls, f.shape[2], f.shape[3])
        assert bp.shape == (f.shape[0], head.oc_reg, f.shape[2], f.shape[3])
        max_err = max(max_err,
                      float(jnp.max(jnp.abs(cs - rcs))),
                      float(jnp.max(jnp.abs(bp - rbp))))
        ok &= bool(jnp.allclose(cs, rcs, atol=5e-3, rtol=5e-2))
        ok &= bool(jnp.allclose(bp, rbp, atol=5e-3, rtol=5e-2))
    if ok:
        print("KERNEL_OK")
    else:
        print(f"KERNEL_MISMATCH max_abs_err={max_err:.6f}")
</pallas_src>

<mosaic_0001>
module attributes {stable_mosaic.version = 11 : i64} {
  func.func @_anchor_head_kernel(%arg0: i32, %arg1: i32, %arg2: memref<1x32x256xf32, #tpu.memory_space<vmem>>, %arg3: memref<9x32xbf16, #tpu.memory_space<vmem>>, %arg4: memref<9x1xf32, #tpu.memory_space<vmem>>, %arg5: memref<36x32xbf16, #tpu.memory_space<vmem>>, %arg6: memref<36x1xf32, #tpu.memory_space<vmem>>, %arg7: memref<1x9x256xf32, #tpu.memory_space<vmem>>, %arg8: memref<1x36x256xf32, #tpu.memory_space<vmem>>) attributes {dimension_semantics = [#tpu.dimension_semantics<parallel>, #tpu.dimension_semantics<parallel>], iteration_bounds = array<i64: 2, 1>, scalar_prefetch = 0 : i64, scratch_operands = 0 : i64, tpu.core_type = #tpu.core_type<tc>, window_params = [{transform_indices = @transform_0, window_bounds = array<i64: 1, 32, 256>}, {pipeline_mode = #tpu.pipeline_mode<synchronous>, transform_indices = @transform_1, window_bounds = array<i64: 9, 32>}, {pipeline_mode = #tpu.pipeline_mode<synchronous>, transform_indices = @transform_2, window_bounds = array<i64: 9, 1>}, {pipeline_mode = #tpu.pipeline_mode<synchronous>, transform_indices = @transform_3, window_bounds = array<i64: 36, 32>}, {pipeline_mode = #tpu.pipeline_mode<synchronous>, transform_indices = @transform_4, window_bounds = array<i64: 36, 1>}, {transform_indices = @transform_5, window_bounds = array<i64: 1, 9, 256>}, {transform_indices = @transform_6, window_bounds = array<i64: 1, 36, 256>}]} {
    %c0 = arith.constant 0 : index
    %c0_0 = arith.constant 0 : index
    %c0_1 = arith.constant 0 : index
    %0 = vector.load %arg2[%c0, %c0_0, %c0_1] : memref<1x32x256xf32, #tpu.memory_space<vmem>>, vector<1x32x256xf32>
    %1 = vector.shape_cast %0 : vector<1x32x256xf32> to vector<32x256xf32>
    %2 = arith.truncf %1 : vector<32x256xf32> to vector<32x256xbf16>
    %c0_2 = arith.constant 0 : index
    %c0_3 = arith.constant 0 : index
    %3 = vector.load %arg3[%c0_2, %c0_3] : memref<9x32xbf16, #tpu.memory_space<vmem>>, vector<9x32xbf16>
    %cst = arith.constant dense<0.000000e+00> : vector<9x256xf32>
    %4 = tpu.matmul %3, %2, %cst {dimension_numbers = #tpu.dot_dimension_numbers<[1], [0], [0], [1], [0, 0, 1, 1], [], []>} : vector<9x32xbf16>, vector<32x256xbf16>, vector<9x256xf32> -> vector<9x256xf32>
    %c0_4 = arith.constant 0 : index
    %c0_5 = arith.constant 0 : index
    %5 = vector.load %arg5[%c0_4, %c0_5] : memref<36x32xbf16, #tpu.memory_space<vmem>>, vector<36x32xbf16>
    %cst_6 = arith.constant dense<0.000000e+00> : vector<36x256xf32>
    %6 = tpu.matmul %5, %2, %cst_6 {dimension_numbers = #tpu.dot_dimension_numbers<[1], [0], [0], [1], [0, 0, 1, 1], [], []>} : vector<36x32xbf16>, vector<32x256xbf16>, vector<36x256xf32> -> vector<36x256xf32>
    %c0_7 = arith.constant 0 : index
    %c0_8 = arith.constant 0 : index
    %7 = vector.load %arg4[%c0_7, %c0_8] : memref<9x1xf32, #tpu.memory_space<vmem>>, vector<9x1xf32>
    %8 = vector.broadcast %7 : vector<9x1xf32> to vector<9x256xf32>
    %9 = arith.addf %4, %8 : vector<9x256xf32>
    %c0_9 = arith.constant 0 : index
    %c0_10 = arith.constant 0 : index
    %c0_11 = arith.constant 0 : index
    %10 = vector.load %arg7[%c0_9, %c0_10, %c0_11] : memref<1x9x256xf32, #tpu.memory_space<vmem>>, vector<1x9x256xf32>
    %11 = vector.shape_cast %10 : vector<1x9x256xf32> to vector<9x256xf32>
    %12 = vector.shape_cast %9 : vector<9x256xf32> to vector<1x9x256xf32>
    tpu.vector_store %arg7[%c0_9, %c0_10, %c0_11], %12 {strides = array<i32>} : memref<1x9x256xf32, #tpu.memory_space<vmem>>, vector<1x9x256xf32>,
    %c0_12 = arith.constant 0 : index
    %c0_13 = arith.constant 0 : index
    %13 = vector.load %arg6[%c0_12, %c0_13] : memref<36x1xf32, #tpu.memory_space<vmem>>, vector<36x1xf32>
    %14 = vector.broadcast %13 : vector<36x1xf32> to vector<36x256xf32>
    %15 = arith.addf %6, %14 : vector<36x256xf32>
    %c0_14 = arith.constant 0 : index
    %c0_15 = arith.constant 0 : index
    %c0_16 = arith.constant 0 : index
    %16 = vector.load %arg8[%c0_14, %c0_15, %c0_16] : memref<1x36x256xf32, #tpu.memory_space<vmem>>, vector<1x36x256xf32>
    %17 = vector.shape_cast %16 : vector<1x36x256xf32> to vector<36x256xf32>
    %18 = vector.shape_cast %15 : vector<36x256xf32> to vector<1x36x256xf32>
    tpu.vector_store %arg8[%c0_14, %c0_15, %c0_16], %18 {strides = array<i32>} : memref<1x36x256xf32, #tpu.memory_space<vmem>>, vector<1x36x256xf32>,
    return
  }
  func.func @transform_0(%arg0: i32, %arg1: i32) -> (i32, i32, i32) {
    %c0_i32 = arith.constant 0 : i32
    %c0_i32_0 = arith.constant 0 : i32
    return %arg0, %c0_i32, %arg1 : i32, i32, i32
  }
  func.func @transform_1(%arg0: i32, %arg1: i32) -> (i32, i32) {
    %c0_i32 = arith.constant 0 : i32
    %c0_i32_0 = arith.constant 0 : i32
    %c0_i32_1 = arith.constant 0 : i32
    return %c0_i32, %c0_i32_0 : i32, i32
  }
  func.func @transform_2(%arg0: i32, %arg1: i32) -> (i32, i32) {
    %c0_i32 = arith.constant 0 : i32
    %c0_i32_0 = arith.constant 0 : i32
    %c0_i32_1 = arith.constant 0 : i32
    return %c0_i32, %c0_i32_0 : i32, i32
  }
  func.func @transform_3(%arg0: i32, %arg1: i32) -> (i32, i32) {
    %c0_i32 = arith.constant 0 : i32
    %c0_i32_0 = arith.constant 0 : i32
    %c0_i32_1 = arith.constant 0 : i32
    return %c0_i32, %c0_i32_0 : i32, i32
  }
  func.func @transform_4(%arg0: i32, %arg1: i32) -> (i32, i32) {
    %c0_i32 = arith.constant 0 : i32
    %c0_i32_0 = arith.constant 0 : i32
    %c0_i32_1 = arith.constant 0 : i32
    return %c0_i32, %c0_i32_0 : i32, i32
  }
  func.func @transform_5(%arg0: i32, %arg1: i32) -> (i32, i32, i32) {
    %c0_i32 = arith.constant 0 : i32
    %c0_i32_0 = arith.constant 0 : i32
    return %arg0, %c0_i32, %arg1 : i32, i32, i32
  }
  func.func @transform_6(%arg0: i32, %arg1: i32) -> (i32, i32, i32) {
    %c0_i32 = arith.constant 0 : i32
    %c0_i32_0 = arith.constant 0 : i32
    return %arg0, %c0_i32, %arg1 : i32, i32, i32
  }
}

</mosaic_0001>

<llo_original>
// kernel: _level_forward.1
$region0: #{_level_forward.1}
  #allocation0 [shape = 'u32[]', space=smem, size = 0x4, offset = 0x4, fixed_abs, tag = 'smem constant byte address 0x4 - core index']
  #allocation1 [shape = 'u32[144,128]{1,0:T(1,128)}', space=vmem, size = 0x12000, scoped, tag = 'internal scratch']
  %s0 = inlined_call_operand.vmem [shape: f32[2,32,256], index: 0, kind: input, shape index: {}]
  %s1 = inlined_call_operand.vmem [shape: bf16[9,32], index: 1, kind: input, shape index: {}]
  %s2 = inlined_call_operand.vmem [shape: f32[9,1], index: 2, kind: input, shape index: {}]
  %s3 = inlined_call_operand.vmem [shape: bf16[36,32], index: 3, kind: input, shape index: {}]
  %s4 = inlined_call_operand.vmem [shape: f32[36,1], index: 4, kind: input, shape index: {}]
  %s5 = inlined_call_operand.vmem [shape: f32[2,9,256], index: 5, kind: output, shape index: {0}]
  %s6 = inlined_call_operand.vmem [shape: f32[2,36,256], index: 6, kind: output, shape index: {1}]
  %7 = xla_tuple %s5, %s6
  %s8 = sld [smem:[#allocation0]]
  $region61: #{_level_forward.1} parent=0
    _
  %s10 = ssub.s32 1, %s8
  %s11 = scalar_select 0, %s10, %s8
  loop: start=0, step=1, limit=4
  $region2: #{_level_forward.1} parent=0 // loop_pre_header
    _
  $region3: #{_level_forward.1} parent=0 // loop_header
    %s13 = sphi 0, %s17
    %p14 = scmp.ge.s32.totalorder %s13, 4
    %s20 = sphi 0, %s32
    %s21 = sphi 0, %s28
    %s22 = sphi 0, %s20
    %s23 = sphi 0, %s21
    %s24 = sphi 0, %s22
    %s25 = sphi 0, %s23
    %s37 = sphi 0, %s39
    %s40 = sphi 0, %s37
    %s41 = sphi 0, %s40
    %s57 = sphi 0, %s41
    %s61 = sphi 0, %s61
    %s63 = sphi 0, %s61
    %s64 = sphi 0, %s63
    %s78 = sphi 0, %s64
    %s82 = sphi 0, %s82
    %s84 = sphi 0, %s82
    %s85 = sphi 0, %s84
    %s99 = sphi 0, %s85
    %s103 = sphi 0, %s103
    %s105 = sphi 0, %s103
    %s106 = sphi 0, %s105
    %s120 = sphi 0, %s106
    %s124 = sphi 0, %s124
    %s126 = sphi 0, %s124
    %s127 = sphi 0, %s126
    %s141 = sphi 0, %s127
    %s149 = sphi 0, %s151
    %s152 = sphi 0, %s149
    %s153 = sphi 0, %s152
    %s169 = sphi 0, %s153
    %s177 = sphi 0, %s179
    %s180 = sphi 0, %s177
    %s181 = sphi 0, %s180
    %s197 = sphi 0, %s181
  $region4: #{_level_forward.1} parent=0 // loop_header_branch
    %16 = sbr.rel (%p14) target = $region8
  $region5: #{_level_forward.1} parent=0 // loop_body
    %s18 = ssub.s32 %s13, 1
    %s19 = ssub.s32 %s13, 2
    %s26 = sadd.s32 1, %s21
    %p27 = scmp.ge.s32.totalorder %s26, 1
    %s28 = scalar_select %p27, 0, %s26
    %s29 = sadd.s32 1, %s20
    %s30 = scalar_select %p27, %s29, %s20
    %p31 = scmp.ge.s32.totalorder %s30, 2
    %s32 = scalar_select %p31, 0, %s30
    %s33 = ssub.s32 %s20, %s32
    %s34 = ssub.s32 %s21, %s28
    %s35 = sor.u32 %s33, %s34
    %p36 = scmp.eq.s32.totalorder %s35, 0
    %s38 = sadd.s32 %s37, 1
    %s39 = scalar_select %p36, %s37, %s38
    %p42 = pneg %p36
    %p43 = scmp.eq.s32.totalorder %s13, 1
    %p44 = por %p42, %p43
    %p45 = scmp.ne.s32.totalorder %s37, %s40
    %p46 = scmp.eq.s32.totalorder %s13, 0
    %p47 = por %p45, %p46
    %p48 = scmp.ne.s32.totalorder %s37, %s40
    %p49 = scmp.eq.s32.totalorder %s18, 1
    %p50 = por %p48, %p49
    %p51 = scmp.ne.s32.totalorder %s40, %s41
    %p52 = scmp.eq.s32.totalorder %s18, 0
    %p53 = por %p51, %p52
    %p54 = scmp.ne.s32.totalorder %s40, %s41
    %p55 = scmp.eq.s32.totalorder %s19, 1
    %p56 = por %p54, %p55
    %p58 = scmp.ne.s32.totalorder %s41, %s57
    %p59 = scmp.eq.s32.totalorder %s19, 0
    %p60 = por %p58, %p59
    %s62 = sadd.s32 %s61, 1
    %p65 = scmp.eq.s32.totalorder %s13, 1
    %p66 = scmp.ne.s32.totalorder %s61, %s63
    %p67 = scmp.eq.s32.totalorder %s13, 0
    %p68 = por %p66, %p67
    %p69 = scmp.ne.s32.totalorder %s61, %s63
    %p70 = scmp.eq.s32.totalorder %s18, 1
    %p71 = por %p69, %p70
    %p72 = scmp.ne.s32.totalorder %s63, %s64
    %p73 = scmp.eq.s32.totalorder %s18, 0
    %p74 = por %p72, %p73
    %p75 = scmp.ne.s32.totalorder %s63, %s64
    %p76 = scmp.eq.s32.totalorder %s19, 1
    %p77 = por %p75, %p76
    %p79 = scmp.ne.s32.totalorder %s64, %s78
    %p80 = scmp.eq.s32.totalorder %s19, 0
    %p81 = por %p79, %p80
    %s83 = sadd.s32 %s82, 1
    %p86 = scmp.eq.s32.totalorder %s13, 1
    %p87 = scmp.ne.s32.totalorder %s82, %s84
    %p88 = scmp.eq.s32.totalorder %s13, 0
    %p89 = por %p87, %p88
    %p90 = scmp.ne.s32.totalorder %s82, %s84
    %p91 = scmp.eq.s32.totalorder %s18, 1
    %p92 = por %p90, %p91
    %p93 = scmp.ne.s32.totalorder %s84, %s85
    %p94 = scmp.eq.s32.totalorder %s18, 0
    %p95 = por %p93, %p94
    %p96 = scmp.ne.s32.totalorder %s84, %s85
    %p97 = scmp.eq.s32.totalorder %s19, 1
    %p98 = por %p96, %p97
    %p100 = scmp.ne.s32.totalorder %s85, %s99
    %p101 = scmp.eq.s32.totalorder %s19, 0
    %p102 = por %p100, %p101
    %s104 = sadd.s32 %s103, 1
    %p107 = scmp.eq.s32.totalorder %s13, 1
    %p108 = scmp.ne.s32.totalorder %s103, %s105
    %p109 = scmp.eq.s32.totalorder %s13, 0
    %p110 = por %p108, %p109
    %p111 = scmp.ne.s32.totalorder %s103, %s105
    %p112 = scmp.eq.s32.totalorder %s18, 1
    %p113 = por %p111, %p112
    %p114 = scmp.ne.s32.totalorder %s105, %s106
    %p115 = scmp.eq.s32.totalorder %s18, 0
    %p116 = por %p114, %p115
    %p117 = scmp.ne.s32.totalorder %s105, %s106
    %p118 = scmp.eq.s32.totalorder %s19, 1
    %p119 = por %p117, %p118
    %p121 = scmp.ne.s32.totalorder %s106, %s120
    %p122 = scmp.eq.s32.totalorder %s19, 0
    %p123 = por %p121, %p122
    %s125 = sadd.s32 %s124, 1
    %p128 = scmp.eq.s32.totalorder %s13, 1
    %p129 = scmp.ne.s32.totalorder %s124, %s126
    %p130 = scmp.eq.s32.totalorder %s13, 0
    %p131 = por %p129, %p130
    %p132 = scmp.ne.s32.totalorder %s124, %s126
    %p133 = scmp.eq.s32.totalorder %s18, 1
    %p134 = por %p132, %p133
    %p135 = scmp.ne.s32.totalorder %s126, %s127
    %p136 = scmp.eq.s32.totalorder %s18, 0
    %p137 = por %p135, %p136
    %p138 = scmp.ne.s32.totalorder %s126, %s127
    %p139 = scmp.eq.s32.totalorder %s19, 1
    %p140 = por %p138, %p139
    %p142 = scmp.ne.s32.totalorder %s127, %s141
    %p143 = scmp.eq.s32.totalorder %s19, 0
    %p144 = por %p142, %p143
    %s145 = ssub.s32 %s20, %s32
    %s146 = ssub.s32 %s21, %s28
    %s147 = sor.u32 %s145, %s146
    %p148 = scmp.eq.s32.totalorder %s147, 0
    %s150 = sadd.s32 %s149, 1
    %s151 = scalar_select %p148, %s149, %s150
    %p154 = pneg %p148
    %p155 = scmp.eq.s32.totalorder %s13, 1
    %p156 = por %p154, %p155
    %p157 = scmp.ne.s32.totalorder %s149, %s152
    %p158 = scmp.eq.s32.totalorder %s13, 0
    %p159 = por %p157, %p158
    %p160 = scmp.ne.s32.totalorder %s149, %s152
    %p161 = scmp.eq.s32.totalorder %s18, 1
    %p162 = por %p160, %p161
    %p163 = scmp.ne.s32.totalorder %s152, %s153
    %p164 = scmp.eq.s32.totalorder %s18, 0
    %p165 = por %p163, %p164
    %p166 = scmp.ne.s32.totalorder %s152, %s153
    %p167 = scmp.eq.s32.totalorder %s19, 1
    %p168 = por %p166, %p167
    %p170 = scmp.ne.s32.totalorder %s153, %s169
    %p171 = scmp.eq.s32.totalorder %s19, 0
    %p172 = por %p170, %p171
    %s173 = ssub.s32 %s20, %s32
    %s174 = ssub.s32 %s21, %s28
    %s175 = sor.u32 %s173, %s174
    %p176 = scmp.eq.s32.totalorder %s175, 0
    %s178 = sadd.s32 %s177, 1
    %s179 = scalar_select %p176, %s177, %s178
    %p182 = pneg %p176
    %p183 = scmp.eq.s32.totalorder %s13, 1
    %p184 = por %p182, %p183
    %p185 = scmp.ne.s32.totalorder %s177, %s180
    %p186 = scmp.eq.s32.totalorder %s13, 0
    %p187 = por %p185, %p186
    %p188 = scmp.ne.s32.totalorder %s177, %s180
    %p189 = scmp.eq.s32.totalorder %s18, 1
    %p190 = por %p188, %p189
    %p191 = scmp.ne.s32.totalorder %s180, %s181
    %p192 = scmp.eq.s32.totalorder %s18, 0
    %p193 = por %p191, %p192
    %p194 = scmp.ne.s32.totalorder %s180, %s181
    %p195 = scmp.eq.s32.totalorder %s19, 1
    %p196 = por %p194, %p195
    %p198 = scmp.ne.s32.totalorder %s181, %s197
    %p199 = scmp.eq.s32.totalorder %s19, 0
    %p200 = por %p198, %p199
    %p201 = scmp.le.s32.totalorder 1, %s13
    %p202 = scmp.lt.s32.totalorder %s13, 3
    %p203 = pnand %p201, %p202
    %p204 = pneg %p203
    // Predicated region
    $region9: #{_level_forward.1} parent=5 // pred_check
      _
    $region10: #{_level_forward.1} parent=5 // pred_check_branch
      %206 = sbr.rel (%p203) target = $region12
    $region11: #{_level_forward.1} parent=5 // pred_region
      %s207 = ssub.s32 %s13, 1
      // Predicated region
      $region13: #{_level_forward.1} parent=11 // pred_check
        %p208 = pneg %p74
      $region14: #{_level_forward.1} parent=11 // pred_check_branch
        %210 = sbr.rel (%p208) target = $region16
      $region15: #{_level_forward.1} parent=11 // pred_region
        _
      $region16: #{_level_forward.1} parent=11 // pred_fallthru
        _
      // Predicated region
      $region17: #{_level_forward.1} parent=11 // pred_check
        %p211 = pneg %p95
      $region18: #{_level_forward.1} parent=11 // pred_check_branch
        %213 = sbr.rel (%p211) target = $region20
      $region19: #{_level_forward.1} parent=11 // pred_region
        _
      $region20: #{_level_forward.1} parent=11 // pred_fallthru
        _
      // Predicated region
      $region21: #{_level_forward.1} parent=11 // pred_check
        %p214 = pneg %p116
      $region22: #{_level_forward.1} parent=11 // pred_check_branch
        %216 = sbr.rel (%p214) target = $region24
      $region23: #{_level_forward.1} parent=11 // pred_region
        _
      $region24: #{_level_forward.1} parent=11 // pred_fallthru
        _
      // Predicated region
      $region25: #{_level_forward.1} parent=11 // pred_check
        %p217 = pneg %p137
      $region26: #{_level_forward.1} parent=11 // pred_check_branch
        %219 = sbr.rel (%p217) target = $region28
      $region27: #{_level_forward.1} parent=11 // pred_region
        _
      $region28: #{_level_forward.1} parent=11 // pred_fallthru
        _
    $region12: #{_level_forward.1} parent=5 // pred_fallthru
      _
    %p220 = scmp.lt.s32.totalorder %s13, 2
    // Predicated region
    $region29: #{_level_forward.1} parent=5 // pred_check
      %p221 = pneg %p220
    $region30: #{_level_forward.1} parent=5 // pred_check_branch
      %223 = sbr.rel (%p221) target = $region32
    $region31: #{_level_forward.1} parent=5 // pred_region
      // Predicated region
      $region33: #{_level_forward.1} parent=31 // pred_check
        %p224 = pneg %p47
      $region34: #{_level_forward.1} parent=31 // pred_check_branch
        %226 = sbr.rel (%p224) target = $region36
      $region35: #{_level_forward.1} parent=31 // pred_region
        %s227 = smul.u32 2, %s21
        %p228 = scmp.lt.s32.totalorder %s20, 1
        %s229 = scalar_select %p228, %s20, 1
        %p230 = scmp.lt.s32.totalorder %s227, 1
        %s231 = scalar_select %p230, %s227, 1
        %s232 = smul.addr %s229, 8
        %s233 = sadd.s32 %s231, %s232
        %s234 = smul.addr %s233, 8
        %s235 = scalar_lea.vmem %s0, %s234
        %s236 = smul.u32 2, %s21
      $region36: #{_level_forward.1} parent=31 // pred_fallthru
        _
    $region32: #{_level_forward.1} parent=5 // pred_fallthru
      _
    %p237 = scmp.le.s32.totalorder 1, %s13
    %p238 = scmp.lt.s32.totalorder %s13, 3
    %p239 = pnand %p237, %p238
    %p240 = pneg %p239
    // Predicated region
    $region37: #{_level_forward.1} parent=5 // pred_check
      _
    $region38: #{_level_forward.1} parent=5 // pred_check_branch
      %242 = sbr.rel (%p239) target = $region40
    $region39: #{_level_forward.1} parent=5 // pred_region
      %s243 = ssub.s32 %s13, 1
      %s244 = smul.u32 2, %s23
      %p245 = scmp.lt.s32.totalorder %s22, 1
      %s246 = scalar_select %p245, %s22, 1
      %p247 = scmp.lt.s32.totalorder %s244, 1
      %s248 = scalar_select %p247, %s244, 1
      %s249 = smul.addr %s246, 8
      %s250 = sadd.s32 %s248, %s249
      %s251 = smul.addr %s250, 8
      %s252 = scalar_lea.vmem %s0, %s251
      %p253 = pneg %p53
      %p254 = pneg %p50
      %p255 = pneg %p74
      %p256 = pneg %p71
      %p257 = pneg %p95
      %p258 = pneg %p92
      %p259 = pneg %p116
      %p260 = pneg %p113
      %p261 = pneg %p137
      %p262 = pneg %p134
      %p263 = pneg %p165
      %p264 = pneg %p162
      %s265 = smul.u32 2, %s23
      %p266 = scmp.lt.s32.totalorder %s22, 1
      %s267 = scalar_select %p266, %s22, 1
      %p268 = scmp.lt.s32.totalorder %s265, 1
      %s269 = scalar_select %p268, %s265, 1
      %s270 = smul.addr %s267, 4
      %s271 = sadd.s32 %s269, %s270
      %s272 = smul.addr %s271, 8
      %s273 = scalar_lea.vmem %s5, %s272
      %p274 = pneg %p193
      %p275 = pneg %p190
      %s276 = smul.u32 2, %s23
      %p277 = scmp.lt.s32.totalorder %s22, 1
      %s278 = scalar_select %p277, %s22, 1
      %p279 = scmp.lt.s32.totalorder %s276, 1
      %s280 = scalar_select %p279, %s276, 1
      %s281 = smul.addr %s278, 10
      %s282 = sadd.s32 %s280, %s281
      %s283 = smul.addr %s282, 8
      %s284 = scalar_lea.vmem %s6, %s283
      %s285 = smul.u32 2, %s23
      %p286 = scmp.lt.s32.totalorder %s22, 1
      %s287 = scalar_select %p286, %s22, 1
      %p288 = scmp.lt.s32.totalorder %s285, 1
      %s289 = scalar_select %p288, %s285, 1
      %s290 = smul.addr %s287, 8
      %s291 = sadd.s32 %s289, %s290
      %s292 = smul.addr %s291, 8
      %s293 = scalar_lea.vmem %s0, %s292
      %s294 = smul.u32 2, %s23
      %s295 = smul.u32 2, %s23
      %p296 = scmp.lt.s32.totalorder %s22, 1
      %s297 = scalar_select %p296, %s22, 1
      %p298 = scmp.lt.s32.totalorder %s295, 1
      %s299 = scalar_select %p298, %s295, 1
      %s300 = smul.addr %s297, 4
      %s301 = sadd.s32 %s299, %s300
      %s302 = smul.addr %s301, 8
      %s303 = scalar_lea.vmem %s5, %s302
      %s304 = smul.u32 2, %s23
      %s305 = smul.u32 2, %s23
      %p306 = scmp.lt.s32.totalorder %s22, 1
      %s307 = scalar_select %p306, %s22, 1
      %p308 = scmp.lt.s32.totalorder %s305, 1
      %s309 = scalar_select %p308, %s305, 1
      %s310 = smul.addr %s307, 10
      %s311 = sadd.s32 %s309, %s310
      %s312 = smul.addr %s311, 8
      %s313 = scalar_lea.vmem %s6, %s312
      %s314 = smul.u32 2, %s23
      %v316 = vld [vmem:[%s293] sm:$0xff]
      %v317 = vld [vmem:[%s293 + $0x8] sm:$0xff]
      %v318 = vld [vmem:[%s293 + $0x10] sm:$0xff]
      %v319 = vld [vmem:[%s293 + $0x18] sm:$0xff]
      %v320 = vld [vmem:[%s293 + $0x20] sm:$0xff]
      %v321 = vld [vmem:[%s293 + $0x28] sm:$0xff]
      %v322 = vld [vmem:[%s293 + $0x30] sm:$0xff]
      %v323 = vld [vmem:[%s293 + $0x38] sm:$0xff]
      %v324 = vpack.c.bf16 %v318, %v316
      %v325 = vpack.c.bf16 %v319, %v317
      %v326 = vpack.c.bf16 %v322, %v320
      %v327 = vpack.c.bf16 %v323, %v321
      %v328 = vld [vmem:[%s1] sm:$0xf]
      %v329 = vld [vmem:[%s1 + $0x4] sm:$0x1]
      %v330 = vld [vmem:[%s3] sm:$0xf]
      %v331 = vld [vmem:[%s3 + $0x4] sm:$0xf]
      %v332 = vld [vmem:[%s3 + $0x8] sm:$0xf]
      %v333 = vld [vmem:[%s3 + $0xc] sm:$0xf]
      %v334 = vld [vmem:[%s3 + $0x10] sm:$0x3]
      %v335 = vld [vmem:[%s2] sm:$0xff]
      %v336 = vld [vmem:[%s2 + $0x8] sm:$0x1]
      %338 = vset.pattern.permute.xlu0 0
      %339 = vperm.xlu0 %338, %v335
      %v340 = vpop.permute.xlu0 %339
      %343 = vset.pattern.permute.xlu0 0
      %344 = vperm.xlu0 %343, %v336
      %v345 = vpop.permute.xlu0 %344
      %v349 = vunpack.c.l.b16 %v328
      %v350 = vunpack.c.l.b16 %v329
      %v351 = vpack.c.b16 %v350, %v349
      %vm352 = vcmask 261120
      %v354 = vsel %vm352, %v351, 0
      %356 = vmatprep.subr.bf16.mxu0 0
      %357 = vmatpush1.bf16.msra.mxu0 0
      %358 = vmatprep.subr.bf16.mxu0 0
      %359 = vmatpush1.bf16.msra.mxu0 0
      %360 = vmatprep.subr.bf16.mxu0 0
      %361 = vmatpush1.bf16.msra.mxu0 0
      %362 = vmatprep.subr.bf16.mxu0 0
      %363 = vmatpush1.bf16.msra.mxu0 0
      %364 = vmatprep.subr.bf16.mxu0 0
      %365 = vmatpush1.bf16.msra.mxu0 0
      %366 = vmatprep.subr.bf16.mxu0 0
      %367 = vmatpush1.bf16.msra.mxu0 0
      %368 = vmatprep.subr.bf16.mxu0 %v327
      %369 = vmatpush1.bf16.msra.mxu0 %v326
      %370 = vmatprep.subr.bf16.mxu0 %v325
      %371 = vmatpush1.bf16.msra.mxu0 %v324
      %372 = vmatprep.subr.bf16.mxu0 0
      %373 = vmatpush2.bf16.msra.mxu0 0
      %374 = vmatprep.subr.bf16.mxu0 0
      %375 = vmatpush2.bf16.msra.mxu0 0
      %376 = vmatprep.subr.bf16.mxu0 0
      %377 = vmatpush2.bf16.msra.mxu0 0
      %378 = vmatprep.subr.bf16.mxu0 0
      %379 = vmatpush2.bf16.msra.mxu0 0
      %380 = vmatprep.subr.bf16.mxu0 0
      %381 = vmatpush2.bf16.msra.mxu0 0
      %382 = vmatprep.subr.bf16.mxu0 0
      %383 = vmatpush2.bf16.msra.mxu0 0
      %384 = vmatprep.subr.bf16.mxu0 0
      %385 = vmatpush2.bf16.msra.mxu0 0
      %386 = vmatprep.subr.bf16.mxu0 0
      %387 = vmatpush2.bf16.msra.mxu0 0
      %388 = vmatprep.mubr.bf16.mxu0 0
      %389 = vmatmul.mubr.bf16.gmra.mxu0 %v354
      %v390 = vpop.f32.mrf.mxu0
      %v391 = vadd.f32 %v340, %v390
      %v392 = vpop.f32.mrf.mxu0
      %v393 = vadd.f32 %v340, %v392
      %v394 = vpop.f32.mrf.mxu0
      %v395 = vadd.f32 %v345, %v394
      %v396 = vpop.f32.mrf.mxu0
      %v397 = vadd.f32 %v345, %v396
      %398 = vdwg.mxu0
      %399 = vst [vmem:[%s303] sm:$0xff] %v391
      %400 = vst [vmem:[%s303 + $0x8] sm:$0xff] %v393
      %401 = vst [vmem:[%s303 + $0x10] sm:$0x1] %v395
      %402 = vst [vmem:[%s303 + $0x18] sm:$0x1] %v397
      %v403 = vld [vmem:[%s4] sm:$0xff]
      %v404 = vld [vmem:[%s4 + $0x8] sm:$0xff]
      %v405 = vld [vmem:[%s4 + $0x10] sm:$0xff]
      %v406 = vld [vmem:[%s4 + $0x18] sm:$0xff]
      %v407 = vld [vmem:[%s4 + $0x20] sm:$0xf]
      %409 = vset.pattern.permute.xlu0 0
      %410 = vperm.xlu0 %409, %v403
      %v411 = vpop.permute.xlu0 %410
      %414 = vset.pattern.permute.xlu0 0
      %415 = vperm.xlu0 %414, %v404
      %v416 = vpop.permute.xlu0 %415
      %419 = vset.pattern.permute.xlu0 0
      %420 = vperm.xlu0 %419, %v405
      %v421 = vpop.permute.xlu0 %420
      %424 = vset.pattern.permute.xlu0 0
      %425 = vperm.xlu0 %424, %v406
      %v426 = vpop.permute.xlu0 %425
      %429 = vset.pattern.permute.xlu0 0
      %430 = vperm.xlu0 %429, %v407
      %v431 = vpop.permute.xlu0 %430
      %v438 = vunpack.c.l.b16 %v330
      %v439 = vunpack.c.l.b16 %v331
      %v440 = vunpack.c.l.b16 %v332
      %v441 = vunpack.c.l.b16 %v333
      %v442 = vunpack.c.l.b16 %v334
      %v443 = vpack.c.b16 %v439, %v438
      %v444 = vpack.c.b16 %v441, %v440
      %v445 = vpack.c.b16 %v442, %v442
      %v447 = vsel %vm352, %v443, 0
      %v450 = vsel %vm352, %v444, 0
      %v453 = vsel %vm352, %v445, 0
      %455 = vmatprep.subr.bf16.mxu0 0
      %456 = vmatpush1.bf16.msra.mxu0 0
      %457 = vmatprep.subr.bf16.mxu0 0
      %458 = vmatpush1.bf16.msra.mxu0 0
      %459 = vmatprep.subr.bf16.mxu0 0
      %460 = vmatpush1.bf16.msra.mxu0 0
      %461 = vmatprep.subr.bf16.mxu0 0
      %462 = vmatpush1.bf16.msra.mxu0 0
      %463 = vmatprep.subr.bf16.mxu0 0
      %464 = vmatpush1.bf16.msra.mxu0 0
      %465 = vmatprep.subr.bf16.mxu0 0
      %466 = vmatpush1.bf16.msra.mxu0 0
      %467 = vmatprep.subr.bf16.mxu0 %v327
      %468 = vmatpush1.bf16.msra.mxu0 %v326
      %469 = vmatprep.subr.bf16.mxu0 %v325
      %470 = vmatpush1.bf16.msra.mxu0 %v324
      %471 = vmatprep.subr.bf16.mxu0 0
      %472 = vmatpush2.bf16.msra.mxu0 0
      %473 = vmatprep.subr.bf16.mxu0 0
      %474 = vmatpush2.bf16.msra.mxu0 0
      %475 = vmatprep.subr.bf16.mxu0 0
      %476 = vmatpush2.bf16.msra.mxu0 0
      %477 = vmatprep.subr.bf16.mxu0 0
      %478 = vmatpush2.bf16.msra.mxu0 0
      %479 = vmatprep.subr.bf16.mxu0 0
      %480 = vmatpush2.bf16.msra.mxu0 0
      %481 = vmatprep.subr.bf16.mxu0 0
      %482 = vmatpush2.bf16.msra.mxu0 0
      %483 = vmatprep.subr.bf16.mxu0 0
      %484 = vmatpush2.bf16.msra.mxu0 0
      %485 = vmatprep.subr.bf16.mxu0 0
      %486 = vmatpush2.bf16.msra.mxu0 0
      %487 = vmatprep.mubr.bf16.mxu0 0
      %488 = vmatmul.mubr.bf16.gmra.mxu0 %v447
      %v489 = vpop.f32.mrf.mxu0
      %v490 = vadd.f32 %v411, %v489
      %v491 = vpop.f32.mrf.mxu0
      %v492 = vadd.f32 %v411, %v491
      %v493 = vpop.f32.mrf.mxu0
      %v494 = vadd.f32 %v416, %v493
      %v495 = vpop.f32.mrf.mxu0
      %v496 = vadd.f32 %v416, %v495
      %497 = vmatprep.mubr.bf16.mxu0 0
      %498 = vmatmul.mubr.bf16.gmra.mxu0 %v450
      %v499 = vpop.f32.mrf.mxu0
      %v500 = vadd.f32 %v421, %v499
      %v501 = vpop.f32.mrf.mxu0
      %v502 = vadd.f32 %v421, %v501
      %v503 = vpop.f32.mrf.mxu0
      %v504 = vadd.f32 %v426, %v503
      %v505 = vpop.f32.mrf.mxu0
      %v506 = vadd.f32 %v426, %v505
      %507 = vmatprep.mubr.bf16.mxu0 0
      %508 = vmatmul.mubr.bf16.gmra.mxu0 %v453
      %v509 = vpop.f32.mrf.mxu0
      %v510 = vadd.f32 %v431, %v509
      %v511 = vpop.f32.mrf.mxu0
      %v512 = vadd.f32 %v431, %v511
      %v513 = vpop.f32.mrf.mxu0
      %v514 = vpop.f32.mrf.mxu0
      %515 = vdwg.mxu0
      %516 = vst [vmem:[%s313] sm:$0xff] %v490
      %517 = vst [vmem:[%s313 + $0x8] sm:$0xff] %v492
      %518 = vst [vmem:[%s313 + $0x10] sm:$0xff] %v494
      %519 = vst [vmem:[%s313 + $0x18] sm:$0xff] %v496
      %520 = vst [vmem:[%s313 + $0x20] sm:$0xff] %v500
      %521 = vst [vmem:[%s313 + $0x28] sm:$0xff] %v502
      %522 = vst [vmem:[%s313 + $0x30] sm:$0xff] %v504
      %523 = vst [vmem:[%s313 + $0x38] sm:$0xff] %v506
      %524 = vst [vmem:[%s313 + $0x40] sm:$0xf] %v510
      %525 = vst [vmem:[%s313 + $0x48] sm:$0xf] %v512
      %s526 = smul.u32 2, %s23
      %p527 = scmp.lt.s32.totalorder %s22, 1
      %s528 = scalar_select %p527, %s22, 1
      %p529 = scmp.lt.s32.totalorder %s526, 1
      %s530 = scalar_select %p529, %s526, 1
      %s531 = smul.addr %s528, 4
      %s532 = sadd.s32 %s530, %s531
      %s533 = smul.addr %s532, 8
      %s534 = scalar_lea.vmem %s5, %s533
      %s535 = smul.u32 2, %s23
      %p536 = scmp.lt.s32.totalorder %s22, 1
      %s537 = scalar_select %p536, %s22, 1
      %p538 = scmp.lt.s32.totalorder %s535, 1
      %s539 = scalar_select %p538, %s535, 1
      %s540 = smul.addr %s537, 10
      %s541 = sadd.s32 %s539, %s540
      %s542 = smul.addr %s541, 8
      %s543 = scalar_lea.vmem %s6, %s542
      // Predicated region
      $region41: #{_level_forward.1} parent=39 // pred_check
        %p544 = pneg %p162
      $region42: #{_level_forward.1} parent=39 // pred_check_branch
        %546 = sbr.rel (%p544) target = $region44
      $region43: #{_level_forward.1} parent=39 // pred_region
        %s547 = smul.u32 2, %s23
      $region44: #{_level_forward.1} parent=39 // pred_fallthru
        _
      // Predicated region
      $region45: #{_level_forward.1} parent=39 // pred_check
        %p548 = pneg %p190
      $region46: #{_level_forward.1} parent=39 // pred_check_branch
        %550 = sbr.rel (%p548) target = $region48
      $region47: #{_level_forward.1} parent=39 // pred_region
        %s551 = smul.u32 2, %s23
      $region48: #{_level_forward.1} parent=39 // pred_fallthru
        _
    $region40: #{_level_forward.1} parent=5 // pred_fallthru
      _
    %p552 = scmp.le.s32.totalorder 2, %s13
    // Predicated region
    $region49: #{_level_forward.1} parent=5 // pred_check
      %p553 = pneg %p552
    $region50: #{_level_forward.1} parent=5 // pred_check_branch
      %555 = sbr.rel (%p553) target = $region52
    $region51: #{_level_forward.1} parent=5 // pred_region
      %s556 = ssub.s32 %s13, 2
      // Predicated region
      $region53: #{_level_forward.1} parent=51 // pred_check
        %p557 = pneg %p168
      $region54: #{_level_forward.1} parent=51 // pred_check_branch
        %559 = sbr.rel (%p557) target = $region56
      $region55: #{_level_forward.1} parent=51 // pred_region
        %s560 = smul.u32 2, %s25
        %p561 = scmp.lt.s32.totalorder %s24, 1
        %s562 = scalar_select %p561, %s24, 1
        %p563 = scmp.lt.s32.totalorder %s560, 1
        %s564 = scalar_select %p563, %s560, 1
        %s565 = smul.addr %s562, 4
        %s566 = sadd.s32 %s564, %s565
        %s567 = smul.addr %s566, 8
        %s568 = scalar_lea.vmem %s5, %s567
      $region56: #{_level_forward.1} parent=51 // pred_fallthru
        _
      // Predicated region
      $region57: #{_level_forward.1} parent=51 // pred_check
        %p569 = pneg %p196
      $region58: #{_level_forward.1} parent=51 // pred_check_branch
        %571 = sbr.rel (%p569) target = $region60
      $region59: #{_level_forward.1} parent=51 // pred_region
        %s572 = smul.u32 2, %s25
        %p573 = scmp.lt.s32.totalorder %s24, 1
        %s574 = scalar_select %p573, %s24, 1
        %p575 = scmp.lt.s32.totalorder %s572, 1
        %s576 = scalar_select %p575, %s572, 1
        %s577 = smul.addr %s574, 10
        %s578 = sadd.s32 %s576, %s577
        %s579 = smul.addr %s578, 8
        %s580 = scalar_lea.vmem %s6, %s579
      $region60: #{_level_forward.1} parent=51 // pred_fallthru
        _
    $region52: #{_level_forward.1} parent=5 // pred_fallthru
      _
  $region6: #{_level_forward.1} parent=0 // loop_footer
    %s17 = sadd.s32 1, %s13
  $region7: #{_level_forward.1} parent=0 // loop_footer_branch
    %12 = sbr.rel target = $region3
  $region8: #{_level_forward.1} parent=0 // loop_exit
    _

</llo_original>
